<compile_context>
chip_gen: v5e
topology: v5e:2x2
jax: 0.10.0
libtpu: 0.0.40
codegen_flags: <defaults>
</compile_context>

<pallas_src>
import numpy as np
import jax
import jax.numpy as jnp
from jax.experimental import pallas as pl
from jax.experimental.pallas import tpu as pltpu

# ----------------------------------------------------------------------------
# Constants from the PyTorch module
# ----------------------------------------------------------------------------
ENERGY_DISTANCE_CUTOFF = 12.0
RING_VDW_RADIUS = 4.3
VDW_RADIUS_COEF = 0.2
CG_MAX_WELLDEPTH = 5.6
CG_MIN_WELLDEPTH = 2 * 0.75
RINGBEAD = np.array([13, 14, 15, 16], dtype=np.int32)

# MARTINI-style interaction levels (deterministic, level0..level9)
_LEVELS = np.array([5.6, 5.0, 4.5, 4.0, 3.5, 3.1, 2.7, 2.3, 2.0, 2.0],
                   dtype=np.float32)

_WELL_DEPTH_IDX = np.array([
    [0,0,0,2,0,0,0,1,1,1,1,1,4,5,6,7,9,9],
    [0,1,0,2,0,0,0,1,1,1,3,1,4,5,6,7,9,9],
    [0,0,1,2,0,0,0,1,1,1,1,3,4,5,6,7,9,9],
    [2,2,2,4,1,0,1,2,3,3,3,3,4,5,6,7,9,9],
    [0,0,0,1,0,0,0,0,0,1,1,1,4,5,6,6,7,8],
    [0,0,0,0,0,1,1,2,2,3,3,3,4,5,6,6,7,8],
    [0,0,0,1,0,1,1,2,2,2,2,2,4,4,5,5,6,7],
    [1,1,1,2,0,2,2,2,2,2,2,2,3,4,4,5,6,7],
    [1,1,1,3,0,2,2,2,2,2,2,2,3,4,4,4,5,6],
    [1,1,1,3,1,3,2,2,2,2,2,2,4,4,5,6,6,6],
    [1,3,1,3,1,3,2,2,2,2,3,2,4,4,5,6,6,6],
    [1,1,3,3,1,3,2,2,2,2,2,3,4,4,5,6,6,6],
    [4,4,4,4,4,4,4,3,3,4,4,4,4,4,4,4,5,6],
    [5,5,5,5,5,5,4,4,4,4,4,4,4,4,4,4,5,5],
    [6,6,6,6,6,6,5,4,4,5,5,5,4,4,4,4,5,5],
    [7,7,7,7,6,6,5,5,4,6,6,6,4,4,4,4,4,4],
    [9,9,9,9,7,7,6,6,5,6,6,6,5,5,5,4,4,4],
    [9,9,9,9,8,8,7,7,6,6,6,6,6,5,5,4,4,4],
], dtype=np.int32)
CG_WELL_DEPTH_MAT = _LEVELS[_WELL_DEPTH_IDX]                     # (18, 18) f32

CG_VDW_RADIUS_MAT = np.full((18, 18), 4.7, dtype=np.float32)     # (18, 18) f32
CG_VDW_RADIUS_MAT[0:4, 16:18] = 6.2
CG_VDW_RADIUS_MAT[16:18, 0:4] = 6.2

# bead2bead_ : deterministic identity map (atom type index -> bead type index)
BEAD2BEAD = np.arange(18, dtype=np.int32)


def _round_up(x, m):
    return ((x + m - 1) // m) * m


# ----------------------------------------------------------------------------
# Pallas kernel
#
# feat_ref block (6, TS, 128): feature-major, pairs on (sublane, lane)
#   [0] a_pre  = emb_i.wA[:D] + emb_j.wA[D:] + bias_A   (head A pre-activation)
#   [1] b_pre  = emb_i.wB[:D] + emb_j.wB[D:] + bias_B   (head B pre-activation)
#   [2] inv_dm = exact 1 / clamped pair distance
#   [3] dm0    = base vdw radius (ring-ring already applied)
#   [4] A_base = base well depth (ring-ring already applied)
#   [5] gid    = graph id of pair; sentinel GPAD for invalid / padded pairs
#
# esum_ref / cnt_ref: (GPAD, 128) lane-partial accumulators (VMEM scratch),
# zeroed on the first grid step, cross-lane-reduced + meaned on the last.
# ----------------------------------------------------------------------------
def energy_decoder_kernel(feat_ref, o_ref, esum_ref, cnt_ref):
    t = pl.program_id(0)

    @pl.when(t == 0)
    def _():
        esum_ref[...] = jnp.zeros_like(esum_ref)
        cnt_ref[...] = jnp.zeros_like(cnt_ref)

    a_pre = feat_ref[0]                         # (TS, 128)
    b_pre = feat_ref[1]
    inv_dm = feat_ref[2]
    dm0b = feat_ref[3]
    a_base = feat_ref[4]
    gid = feat_ref[5]

    # cal_vdw_interaction_A: Linear -> Softplus (numerically stable)
    A_lin = jnp.maximum(a_pre, 0.0) + jnp.log(1.0 + jnp.exp(-jnp.abs(a_pre)))
    # cal_vdw_interaction_B: Linear -> Tanh, scaled
    B = jnp.tanh(b_pre) * VDW_RADIUS_COEF

    # LJ 12-6 term (exact inverse distance precomputed in the wrapper)
    ratio = (dm0b + B) * inv_dm
    r2 = ratio * ratio
    r6 = r2 * r2 * r2
    energy = jnp.minimum(r6 * r6 - r6, 100.0)        # clamp(max=100)
    A = jnp.clip(A_lin * a_base, CG_MIN_WELLDEPTH, CG_MAX_WELLDEPTH)
    energy = A * energy                              # invalid pairs never match a gid

    # scatter_mean accumulation: per-graph lane partials (pure VPU per tile,
    # single cross-lane reduce deferred to the finalize step).
    # gids are < 2^24 so the float->int conversion / compare is exact.
    gid_i = gid.astype(jnp.int32)
    gpad = esum_ref.shape[0]
    e_rows = []
    c_rows = []
    for g in range(gpad):                            # gpad is small & static
        m = (gid_i == g).astype(jnp.float32)         # (TS, 128)
        e_rows.append(jnp.sum(m * energy, axis=0, keepdims=True))   # (1, 128)
        c_rows.append(jnp.sum(m, axis=0, keepdims=True))
    esum_ref[...] += jnp.concatenate(e_rows, axis=0)  # (GPAD, 128)
    cnt_ref[...] += jnp.concatenate(c_rows, axis=0)

    # finalize on the last tile: cross-lane reduce + per-graph mean
    @pl.when(t == pl.num_programs(0) - 1)
    def _():
        es = jnp.sum(esum_ref[...], axis=1, keepdims=True)   # (GPAD, 1)
        c = jnp.sum(cnt_ref[...], axis=1, keepdims=True)     # (GPAD, 1)
        mean = jnp.where(c > 0.0, es / jnp.maximum(c, 1.0), 0.0)
        o_ref[...] = jnp.broadcast_to(mean, o_ref.shape)


def run_energy_kernel(feat, gpad, ts):
    f_rows, s_pad, _ = feat.shape
    n_tiles = s_pad // ts
    return pl.pallas_call(
        energy_decoder_kernel,
        out_shape=jax.ShapeDtypeStruct((gpad, 128), jnp.float32),
        grid_spec=pltpu.PrefetchScalarGridSpec(
            num_scalar_prefetch=0,
            grid=(n_tiles,),
            in_specs=[
                pl.BlockSpec((f_rows, ts, 128), lambda i: (0, i, 0)),
            ],
            out_specs=pl.BlockSpec((gpad, 128), lambda i: (0, 0)),
            scratch_shapes=[
                pltpu.VMEM((gpad, 128), jnp.float32),   # per-graph energy lane-partials
                pltpu.VMEM((gpad, 128), jnp.float32),   # per-graph pair-count lane-partials
            ],
        ),
        compiler_params=pltpu.CompilerParams(
            dimension_semantics=("arbitrary",),   # sequential reduction over pair tiles
            vmem_limit_bytes=32 * 1024 * 1024,    # safe on v5e / v6e / v7x
        ),
        # TODO(synk): on v7x, add a leading size-2 "parallel" axis (dual TC)
        # with per-core partials and a tiny combine.
    )(feat)


# ----------------------------------------------------------------------------
# Full forward (graph preprocessing in plain JAX, energy hot path in Pallas)
# ----------------------------------------------------------------------------
def energy_decoder_forward(graph, bead_emb, mlp_params, params):
    node_emb = bead_emb["node_feature"]       # (N, D)
    graph_emb = bead_emb["graph_feature"]     # (G, Dg)
    pos = graph["node_position"]              # (N, 3)
    node2graph = graph["node2graph"]          # (N,)
    atom_type = graph["atom_type"]            # (N, k) -> column 0 used
    bead2residue = graph["bead2residue"]      # (N,)
    intermol_mat = graph["intermol_mat"]      # (E, 2) residue indices
    G = int(graph["batch_size"])
    N = pos.shape[0]
    D = node_emb.shape[1]

    # interface residues (duplicates are harmless w.r.t. isin)
    bead_mask_partA = jnp.isin(bead2residue, intermol_mat[:, 0])
    bead_mask_partB = jnp.isin(bead2residue, intermol_mat[:, 1])

    # radius_graph replacement: all N*N ordered pairs with a validity mask
    # TODO(synk): for large N, replace the materialized O(N^2) slab with an
    # in-kernel (i-tile, j-tile) grid over O(N) per-node tables.
    ii, jj = jnp.meshgrid(jnp.arange(N), jnp.arange(N), indexing="ij")
    pair_i = ii.reshape(-1)
    pair_j = jj.reshape(-1)
    diff = pos[pair_i] - pos[pair_j]
    dist = jnp.sqrt(jnp.sum(diff * diff, axis=-1) + 1e-10)
    valid = (
        (pair_i != pair_j)
        & (dist < ENERGY_DISTANCE_CUTOFF)
        & (node2graph[pair_i] == node2graph[pair_j])
        & bead_mask_partA[pair_i]
        & bead_mask_partB[pair_j]
    )
    dm = jnp.maximum(dist, 0.5)               # euclidean_distance(dm_min=0.5)
    inv_dm = 1.0 / dm                         # exact f32 divide, fused in slab build

    # bead types and lookup-table gathers (glue)
    raw_ti = atom_type[pair_i, 0]
    raw_tj = atom_type[pair_j, 0]
    ring_ring = jnp.isin(raw_ti, jnp.asarray(RINGBEAD)) & \
                jnp.isin(raw_tj, jnp.asarray(RINGBEAD))
    b2b = jnp.asarray(BEAD2BEAD)
    ti = b2b[raw_ti]
    tj = b2b[raw_tj]
    dm0_base = jnp.asarray(CG_VDW_RADIUS_MAT)[ti, tj]
    dm0_base = jnp.where(ring_ring, RING_VDW_RADIUS, dm0_base)
    A_base = jnp.asarray(CG_WELL_DEPTH_MAT)[ti, tj]
    A_base = jnp.where(ring_ring, A_base * 0.75, A_base)

    # rank-1 head projections: one tiny (N,D)@(D,4) matmul replaces the
    # (P, 2D) pair-embedding stream entirely; biases folded here.
    wA, wB = params["wA"], params["wB"]               # (2D, 1) each
    w_proj = jnp.concatenate([wA[:D, :], wA[D:, :], wB[:D, :], wB[D:, :]],
                             axis=1)                  # (D, 4)
    proj = node_emb @ w_proj                          # (N, 4)
    bias_A = params["bias"][0, 0]
    bias_B = params["bias"][0, 1]
    a_pre = proj[pair_i, 0] + proj[pair_j, 1] + bias_A
    b_pre = proj[pair_i, 2] + proj[pair_j, 3] + bias_B

    # sentinel graph id for invalid pairs (and padding) -> never accumulated
    gpad = max(8, _round_up(G, 8))
    gid = jnp.where(valid, node2graph[pair_i], gpad).astype(jnp.float32)

    # pack the feature-major slab: (6, S_pad, 128), pairs on (sublane, lane)
    P = N * N
    tp = min(16384, _round_up(P, 1024))       # pairs per grid step (TS mult. of 8)
    p_pad = _round_up(P, tp)
    ts = tp // 128
    s_pad = p_pad // 128
    pad = p_pad - P

    def padto(x, val):
        x = x.astype(jnp.float32)
        if pad:
            x = jnp.pad(x, (0, pad), constant_values=val)
        return x.reshape(s_pad, 128)

    feat = jnp.stack([
        padto(a_pre, 0.0),
        padto(b_pre, 0.0),
        padto(inv_dm, 1.0),
        padto(dm0_base, 1.0),
        padto(A_base, 1.0),
        padto(gid, float(gpad)),
    ], axis=0)                                        # (6, S_pad, 128)

    out = run_energy_kernel(feat, gpad, ts)           # (GPAD, 128)
    mean = out[:G, 0:1]                               # (G, 1) per-graph LJ mean

    # LJ2property affine on G scalars (trivial in XLA, kept out of the kernel)
    w_lj = params["lj"][0, 0]
    b_lj = params["lj"][0, 1]
    final_energy = mean * w_lj + b_lj                 # (G, 1)

    # energy_shortcut=True: pred = mlp(graph_emb + final_energy)   (glue)
    pred = (graph_emb + final_energy) @ mlp_params["w"] + mlp_params["b"]

    # whether_der=False -> zero derivative losses
    # TODO(synk): whether_der=True path (autograd wrt positions) not ported.
    der1 = jnp.sum(jnp.zeros_like(final_energy))
    der2 = jnp.sum(jnp.zeros_like(final_energy))
    return pred, der1, der2


# ----------------------------------------------------------------------------
# Main
# ----------------------------------------------------------------------------
if __name__ == "__main__":
    key = jax.random.PRNGKey(0)
    ks = jax.random.split(key, 10)

    N = 16            # beads
    G = 2             # graphs
    D = 32            # bead_emb_dim
    Dg = 32           # graph feature dim

    # synthetic graph
    node_position = jax.random.uniform(ks[0], (N, 3), jnp.float32) * 8.0
    node2graph = jnp.concatenate([jnp.zeros(N // 2, jnp.int32),
                                  jnp.ones(N // 2, jnp.int32)])
    atom_type = jax.random.randint(ks[1], (N, 1), 0, 18).astype(jnp.int32)
    bead2residue = (jnp.arange(N, dtype=jnp.int32) // 2)
    intermol_mat = jnp.array([[0, 2], [1, 3], [4, 6], [5, 7]], jnp.int32)
    graph = dict(node_position=node_position, node2graph=node2graph,
                 atom_type=atom_type, bead2residue=bead2residue,
                 intermol_mat=intermol_mat, batch_size=G)

    # synthetic embeddings
    bead_emb = dict(
        node_feature=jax.random.normal(ks[2], (N, D), jnp.float32) * 0.5,
        graph_feature=jax.random.normal(ks[3], (G, Dg), jnp.float32) * 0.5,
    )

    # deterministic parameters (EnergyDecoder.__init__ shapes)
    params = dict(
        wA=jax.random.normal(ks[4], (2 * D, 1), jnp.float32) * 0.1,   # Linear(2D,1)
        wB=jax.random.normal(ks[5], (2 * D, 1), jnp.float32) * 0.1,   # Linear(2D,1)
        bias=jnp.array([[0.05, -0.02]], jnp.float32),                 # [bA, bB]
        lj=jnp.array([[0.8, 0.1]], jnp.float32),                      # LJ2property [w, b]
    )
    mlp_params = dict(
        w=jax.random.normal(ks[6], (Dg, 1), jnp.float32) * 0.1,
        b=jnp.zeros((1,), jnp.float32),
    )

    pred, der1, der2 = energy_decoder_forward(graph, bead_emb, mlp_params, params)
    jax.block_until_ready((pred, der1, der2))
    print("KERNEL_OK")
</pallas_src>

<mosaic_0001>
module attributes {stable_mosaic.version = 11 : i64} {
  func.func @energy_decoder_kernel(%arg0: i32, %arg1: memref<6x8x128xf32, #tpu.memory_space<vmem>>, %arg2: memref<8x128xf32, #tpu.memory_space<vmem>>, %arg3: memref<8x128xf32, #tpu.memory_space<vmem>>, %arg4: memref<8x128xf32, #tpu.memory_space<vmem>>) attributes {dimension_semantics = [#tpu.dimension_semantics<arbitrary>], iteration_bounds = array<i64: 1>, scalar_prefetch = 0 : i64, scratch_operands = 2 : i64, tpu.core_type = #tpu.core_type<tc>, window_params = [{transform_indices = @transform_0, window_bounds = array<i64: 6, 8, 128>}, {pipeline_mode = #tpu.pipeline_mode<synchronous>, transform_indices = @transform_1, window_bounds = array<i64: 8, 128>}]} {
    %c0_i32 = arith.constant 0 : i32
    %0 = arith.cmpi eq, %arg0, %c0_i32 : i32
    %1 = arith.extui %0 : i1 to i32
    %c0_i32_0 = arith.constant 0 : i32
    %2 = arith.cmpi ne, %1, %c0_i32_0 : i32
    scf.if %2 {
      %cst_46 = arith.constant 0.000000e+00 : f32
      %127 = vector.broadcast %cst_46 : f32 to vector<8x128xf32>
      %c0_47 = arith.constant 0 : index
      %c0_48 = arith.constant 0 : index
      %128 = vector.load %arg3[%c0_47, %c0_48] : memref<8x128xf32, #tpu.memory_space<vmem>>, vector<8x128xf32>
      tpu.vector_store %arg3[%c0_47, %c0_48], %127 {strides = array<i32>} : memref<8x128xf32, #tpu.memory_space<vmem>>, vector<8x128xf32>,
      %cst_49 = arith.constant 0.000000e+00 : f32
      %129 = vector.broadcast %cst_49 : f32 to vector<8x128xf32>
      %c0_50 = arith.constant 0 : index
      %c0_51 = arith.constant 0 : index
      %130 = vector.load %arg4[%c0_50, %c0_51] : memref<8x128xf32, #tpu.memory_space<vmem>>, vector<8x128xf32>
      tpu.vector_store %arg4[%c0_50, %c0_51], %129 {strides = array<i32>} : memref<8x128xf32, #tpu.memory_space<vmem>>, vector<8x128xf32>,
    } else {
    }
    %c0 = arith.constant 0 : index
    %c0_1 = arith.constant 0 : index
    %c0_2 = arith.constant 0 : index
    %3 = vector.load %arg1[%c0, %c0_1, %c0_2] : memref<6x8x128xf32, #tpu.memory_space<vmem>>, vector<1x8x128xf32>
    %4 = vector.shape_cast %3 : vector<1x8x128xf32> to vector<8x128xf32>
    %c1 = arith.constant 1 : index
    %c0_3 = arith.constant 0 : index
    %c0_4 = arith.constant 0 : index
    %5 = vector.load %arg1[%c1, %c0_3, %c0_4] : memref<6x8x128xf32, #tpu.memory_space<vmem>>, vector<1x8x128xf32>
    %6 = vector.shape_cast %5 : vector<1x8x128xf32> to vector<8x128xf32>
    %c2 = arith.constant 2 : index
    %c0_5 = arith.constant 0 : index
    %c0_6 = arith.constant 0 : index
    %7 = vector.load %arg1[%c2, %c0_5, %c0_6] : memref<6x8x128xf32, #tpu.memory_space<vmem>>, vector<1x8x128xf32>
    %8 = vector.shape_cast %7 : vector<1x8x128xf32> to vector<8x128xf32>
    %c3 = arith.constant 3 : index
    %c0_7 = arith.constant 0 : index
    %c0_8 = arith.constant 0 : index
    %9 = vector.load %arg1[%c3, %c0_7, %c0_8] : memref<6x8x128xf32, #tpu.memory_space<vmem>>, vector<1x8x128xf32>
    %10 = vector.shape_cast %9 : vector<1x8x128xf32> to vector<8x128xf32>
    %c4 = arith.constant 4 : index
    %c0_9 = arith.constant 0 : index
    %c0_10 = arith.constant 0 : index
    %11 = vector.load %arg1[%c4, %c0_9, %c0_10] : memref<6x8x128xf32, #tpu.memory_space<vmem>>, vector<1x8x128xf32>
    %12 = vector.shape_cast %11 : vector<1x8x128xf32> to vector<8x128xf32>
    %c5 = arith.constant 5 : index
    %c0_11 = arith.constant 0 : index
    %c0_12 = arith.constant 0 : index
    %13 = vector.load %arg1[%c5, %c0_11, %c0_12] : memref<6x8x128xf32, #tpu.memory_space<vmem>>, vector<1x8x128xf32>
    %14 = vector.shape_cast %13 : vector<1x8x128xf32> to vector<8x128xf32>
    %cst = arith.constant 0.000000e+00 : f32
    %15 = vector.broadcast %cst : f32 to vector<8x128xf32>
    %16 = arith.maximumf %4, %15 : vector<8x128xf32>
    %17 = math.absf %4 : vector<8x128xf32>
    %cst_13 = arith.constant 0.000000e+00 : f32
    %18 = vector.broadcast %cst_13 : f32 to vector<8x128xf32>
    %19 = arith.subf %18, %17 : vector<8x128xf32>
    %20 = math.exp %19 : vector<8x128xf32>
    %cst_14 = arith.constant 1.000000e+00 : f32
    %21 = vector.broadcast %cst_14 : f32 to vector<8x128xf32>
    %22 = arith.addf %21, %20 : vector<8x128xf32>
    %23 = math.log %22 : vector<8x128xf32>
    %24 = arith.addf %16, %23 : vector<8x128xf32>
    %25 = math.tanh %6 : vector<8x128xf32>
    %cst_15 = arith.constant 2.000000e-01 : f32
    %26 = vector.broadcast %cst_15 : f32 to vector<8x128xf32>
    %27 = arith.mulf %25, %26 : vector<8x128xf32>
    %28 = arith.addf %10, %27 : vector<8x128xf32>
    %29 = arith.mulf %28, %8 : vector<8x128xf32>
    %30 = arith.mulf %29, %29 : vector<8x128xf32>
    %31 = arith.mulf %30, %30 : vector<8x128xf32>
    %32 = arith.mulf %31, %30 : vector<8x128xf32>
    %33 = arith.mulf %32, %32 : vector<8x128xf32>
    %34 = arith.subf %33, %32 : vector<8x128xf32>
    %cst_16 = arith.constant 1.000000e+02 : f32
    %35 = vector.broadcast %cst_16 : f32 to vector<8x128xf32>
    %36 = arith.minimumf %34, %35 : vector<8x128xf32>
    %37 = arith.mulf %24, %12 : vector<8x128xf32>
    %cst_17 = arith.constant 1.500000e+00 : f32
    %cst_18 = arith.constant 5.600000e+00 : f32
    %38 = vector.broadcast %cst_17 : f32 to vector<8x128xf32>
    %39 = arith.maximumf %38, %37 : vector<8x128xf32>
    %40 = vector.broadcast %cst_18 : f32 to vector<8x128xf32>
    %41 = arith.minimumf %40, %39 : vector<8x128xf32>
    %42 = arith.mulf %41, %36 : vector<8x128xf32>
    %43 = arith.fptosi %14 : vector<8x128xf32> to vector<8x128xi32>
    %c0_i32_19 = arith.constant 0 : i32
    %44 = vector.broadcast %c0_i32_19 : i32 to vector<8x128xi32>
    %45 = arith.cmpi eq, %43, %44 : vector<8x128xi32>
    %46 = arith.extui %45 : vector<8x128xi1> to vector<8x128xi32>
    %47 = arith.sitofp %46 : vector<8x128xi32> to vector<8x128xf32>
    %48 = arith.mulf %47, %42 : vector<8x128xf32>
    %cst_20 = arith.constant dense<0.000000e+00> : vector<128xf32>
    %49 = vector.multi_reduction <add>, %48, %cst_20 [0] : vector<8x128xf32> to vector<128xf32>
    %50 = vector.shape_cast %49 : vector<128xf32> to vector<1x128xf32>
    %cst_21 = arith.constant dense<0.000000e+00> : vector<128xf32>
    %51 = vector.multi_reduction <add>, %47, %cst_21 [0] : vector<8x128xf32> to vector<128xf32>
    %52 = vector.shape_cast %51 : vector<128xf32> to vector<1x128xf32>
    %c1_i32 = arith.constant 1 : i32
    %53 = vector.broadcast %c1_i32 : i32 to vector<8x128xi32>
    %54 = arith.cmpi eq, %43, %53 : vector<8x128xi32>
    %55 = arith.extui %54 : vector<8x128xi1> to vector<8x128xi32>
    %56 = arith.sitofp %55 : vector<8x128xi32> to vector<8x128xf32>
    %57 = arith.mulf %56, %42 : vector<8x128xf32>
    %cst_22 = arith.constant dense<0.000000e+00> : vector<128xf32>
    %58 = vector.multi_reduction <add>, %57, %cst_22 [0] : vector<8x128xf32> to vector<128xf32>
    %59 = vector.shape_cast %58 : vector<128xf32> to vector<1x128xf32>
    %cst_23 = arith.constant dense<0.000000e+00> : vector<128xf32>
    %60 = vector.multi_reduction <add>, %56, %cst_23 [0] : vector<8x128xf32> to vector<128xf32>
    %61 = vector.shape_cast %60 : vector<128xf32> to vector<1x128xf32>
    %c2_i32 = arith.constant 2 : i32
    %62 = vector.broadcast %c2_i32 : i32 to vector<8x128xi32>
    %63 = arith.cmpi eq, %43, %62 : vector<8x128xi32>
    %64 = arith.extui %63 : vector<8x128xi1> to vector<8x128xi32>
    %65 = arith.sitofp %64 : vector<8x128xi32> to vector<8x128xf32>
    %66 = arith.mulf %65, %42 : vector<8x128xf32>
    %cst_24 = arith.constant dense<0.000000e+00> : vector<128xf32>
    %67 = vector.multi_reduction <add>, %66, %cst_24 [0] : vector<8x128xf32> to vector<128xf32>
    %68 = vector.shape_cast %67 : vector<128xf32> to vector<1x128xf32>
    %cst_25 = arith.constant dense<0.000000e+00> : vector<128xf32>
    %69 = vector.multi_reduction <add>, %65, %cst_25 [0] : vector<8x128xf32> to vector<128xf32>
    %70 = vector.shape_cast %69 : vector<128xf32> to vector<1x128xf32>
    %c3_i32 = arith.constant 3 : i32
    %71 = vector.broadcast %c3_i32 : i32 to vector<8x128xi32>
    %72 = arith.cmpi eq, %43, %71 : vector<8x128xi32>
    %73 = arith.extui %72 : vector<8x128xi1> to vector<8x128xi32>
    %74 = arith.sitofp %73 : vector<8x128xi32> to vector<8x128xf32>
    %75 = arith.mulf %74, %42 : vector<8x128xf32>
    %cst_26 = arith.constant dense<0.000000e+00> : vector<128xf32>
    %76 = vector.multi_reduction <add>, %75, %cst_26 [0] : vector<8x128xf32> to vector<128xf32>
    %77 = vector.shape_cast %76 : vector<128xf32> to vector<1x128xf32>
    %cst_27 = arith.constant dense<0.000000e+00> : vector<128xf32>
    %78 = vector.multi_reduction <add>, %74, %cst_27 [0] : vector<8x128xf32> to vector<128xf32>
    %79 = vector.shape_cast %78 : vector<128xf32> to vector<1x128xf32>
    %c4_i32 = arith.constant 4 : i32
    %80 = vector.broadcast %c4_i32 : i32 to vector<8x128xi32>
    %81 = arith.cmpi eq, %43, %80 : vector<8x128xi32>
    %82 = arith.extui %81 : vector<8x128xi1> to vector<8x128xi32>
    %83 = arith.sitofp %82 : vector<8x128xi32> to vector<8x128xf32>
    %84 = arith.mulf %83, %42 : vector<8x128xf32>
    %cst_28 = arith.constant dense<0.000000e+00> : vector<128xf32>
    %85 = vector.multi_reduction <add>, %84, %cst_28 [0] : vector<8x128xf32> to vector<128xf32>
    %86 = vector.shape_cast %85 : vector<128xf32> to vector<1x128xf32>
    %cst_29 = arith.constant dense<0.000000e+00> : vector<128xf32>
    %87 = vector.multi_reduction <add>, %83, %cst_29 [0] : vector<8x128xf32> to vector<128xf32>
    %88 = vector.shape_cast %87 : vector<128xf32> to vector<1x128xf32>
    %c5_i32 = arith.constant 5 : i32
    %89 = vector.broadcast %c5_i32 : i32 to vector<8x128xi32>
    %90 = arith.cmpi eq, %43, %89 : vector<8x128xi32>
    %91 = arith.extui %90 : vector<8x128xi1> to vector<8x128xi32>
    %92 = arith.sitofp %91 : vector<8x128xi32> to vector<8x128xf32>
    %93 = arith.mulf %92, %42 : vector<8x128xf32>
    %cst_30 = arith.constant dense<0.000000e+00> : vector<128xf32>
    %94 = vector.multi_reduction <add>, %93, %cst_30 [0] : vector<8x128xf32> to vector<128xf32>
    %95 = vector.shape_cast %94 : vector<128xf32> to vector<1x128xf32>
    %cst_31 = arith.constant dense<0.000000e+00> : vector<128xf32>
    %96 = vector.multi_reduction <add>, %92, %cst_31 [0] : vector<8x128xf32> to vector<128xf32>
    %97 = vector.shape_cast %96 : vector<128xf32> to vector<1x128xf32>
    %c6_i32 = arith.constant 6 : i32
    %98 = vector.broadcast %c6_i32 : i32 to vector<8x128xi32>
    %99 = arith.cmpi eq, %43, %98 : vector<8x128xi32>
    %100 = arith.extui %99 : vector<8x128xi1> to vector<8x128xi32>
    %101 = arith.sitofp %100 : vector<8x128xi32> to vector<8x128xf32>
    %102 = arith.mulf %101, %42 : vector<8x128xf32>
    %cst_32 = arith.constant dense<0.000000e+00> : vector<128xf32>
    %103 = vector.multi_reduction <add>, %102, %cst_32 [0] : vector<8x128xf32> to vector<128xf32>
    %104 = vector.shape_cast %103 : vector<128xf32> to vector<1x128xf32>
    %cst_33 = arith.constant dense<0.000000e+00> : vector<128xf32>
    %105 = vector.multi_reduction <add>, %101, %cst_33 [0] : vector<8x128xf32> to vector<128xf32>
    %106 = vector.shape_cast %105 : vector<128xf32> to vector<1x128xf32>
    %c7_i32 = arith.constant 7 : i32
    %107 = vector.broadcast %c7_i32 : i32 to vector<8x128xi32>
    %108 = arith.cmpi eq, %43, %107 : vector<8x128xi32>
    %109 = arith.extui %108 : vector<8x128xi1> to vector<8x128xi32>
    %110 = arith.sitofp %109 : vector<8x128xi32> to vector<8x128xf32>
    %111 = arith.mulf %110, %42 : vector<8x128xf32>
    %cst_34 = arith.constant dense<0.000000e+00> : vector<128xf32>
    %112 = vector.multi_reduction <add>, %111, %cst_34 [0] : vector<8x128xf32> to vector<128xf32>
    %113 = vector.shape_cast %112 : vector<128xf32> to vector<1x128xf32>
    %cst_35 = arith.constant dense<0.000000e+00> : vector<128xf32>
    %114 = vector.multi_reduction <add>, %110, %cst_35 [0] : vector<8x128xf32> to vector<128xf32>
    %115 = vector.shape_cast %114 : vector<128xf32> to vector<1x128xf32>
    %c0_36 = arith.constant 0 : index
    %c0_37 = arith.constant 0 : index
    %116 = vector.load %arg3[%c0_36, %c0_37] : memref<8x128xf32, #tpu.memory_space<vmem>>, vector<8x128xf32>
    %117 = tpu.concatenate %50, %59, %68, %77, %86, %95, %104, %113 in 0 : vector<1x128xf32>, vector<1x128xf32>, vector<1x128xf32>, vector<1x128xf32>, vector<1x128xf32>, vector<1x128xf32>, vector<1x128xf32>, vector<1x128xf32> -> vector<8x128xf32>
    %118 = arith.addf %116, %117 : vector<8x128xf32>
    %c0_38 = arith.constant 0 : index
    %c0_39 = arith.constant 0 : index
    %119 = vector.load %arg3[%c0_38, %c0_39] : memref<8x128xf32, #tpu.memory_space<vmem>>, vector<8x128xf32>
    tpu.vector_store %arg3[%c0_38, %c0_39], %118 {strides = array<i32>} : memref<8x128xf32, #tpu.memory_space<vmem>>, vector<8x128xf32>,
    %c0_40 = arith.constant 0 : index
    %c0_41 = arith.constant 0 : index
    %120 = vector.load %arg4[%c0_40, %c0_41] : memref<8x128xf32, #tpu.memory_space<vmem>>, vector<8x128xf32>
    %121 = tpu.concatenate %52, %61, %70, %79, %88, %97, %106, %115 in 0 : vector<1x128xf32>, vector<1x128xf32>, vector<1x128xf32>, vector<1x128xf32>, vector<1x128xf32>, vector<1x128xf32>, vector<1x128xf32>, vector<1x128xf32> -> vector<8x128xf32>
    %122 = arith.addf %120, %121 : vector<8x128xf32>
    %c0_42 = arith.constant 0 : index
    %c0_43 = arith.constant 0 : index
    %123 = vector.load %arg4[%c0_42, %c0_43] : memref<8x128xf32, #tpu.memory_space<vmem>>, vector<8x128xf32>
    tpu.vector_store %arg4[%c0_42, %c0_43], %122 {strides = array<i32>} : memref<8x128xf32, #tpu.memory_space<vmem>>, vector<8x128xf32>,
    %c0_i32_44 = arith.constant 0 : i32
    %124 = arith.cmpi eq, %arg0, %c0_i32_44 : i32
    %125 = arith.extui %124 : i1 to i32
    %c0_i32_45 = arith.constant 0 : i32
    %126 = arith.cmpi ne, %125, %c0_i32_45 : i32
    scf.if %126 {
      %c0_46 = arith.constant 0 : index
      %c0_47 = arith.constant 0 : index
      %127 = vector.load %arg3[%c0_46, %c0_47] : memref<8x128xf32, #tpu.memory_space<vmem>>, vector<8x128xf32>
      %cst_48 = arith.constant dense<0.000000e+00> : vector<8xf32>
      %128 = vector.multi_reduction <add>, %127, %cst_48 [1] : vector<8x128xf32> to vector<8xf32>
      %129 = vector.shape_cast %128 : vector<8xf32> to vector<8x1xf32>
      %c0_49 = arith.constant 0 : index
      %c0_50 = arith.constant 0 : index
      %130 = vector.load %arg4[%c0_49, %c0_50] : memref<8x128xf32, #tpu.memory_space<vmem>>, vector<8x128xf32>
      %cst_51 = arith.constant dense<0.000000e+00> : vector<8xf32>
      %131 = vector.multi_reduction <add>, %130, %cst_51 [1] : vector<8x128xf32> to vector<8xf32>
      %132 = vector.shape_cast %131 : vector<8xf32> to vector<8x1xf32>
      %cst_52 = arith.constant 0.000000e+00 : f32
      %133 = vector.broadcast %cst_52 : f32 to vector<8x1xf32>
      %134 = arith.cmpf ogt, %132, %133 : vector<8x1xf32>
      %cst_53 = arith.constant 1.000000e+00 : f32
      %135 = vector.broadcast %cst_53 : f32 to vector<8x1xf32>
      %136 = arith.maximumf %132, %135 : vector<8x1xf32>
      %137 = arith.divf %129, %136 : vector<8x1xf32>
      %cst_54 = arith.constant 0.000000e+00 : f32
      %138 = vector.broadcast %cst_54 : f32 to vector<8x1xf32>
      %139 = arith.select %134, %137, %138 : vector<8x1xi1>, vector<8x1xf32>
      %140 = vector.shape_cast %139 : vector<8x1xf32> to vector<8x1xf32>
      %141 = vector.broadcast %140 : vector<8x1xf32> to vector<8x128xf32>
      %c0_55 = arith.constant 0 : index
      %c0_56 = arith.constant 0 : index
      %142 = vector.load %arg2[%c0_55, %c0_56] : memref<8x128xf32, #tpu.memory_space<vmem>>, vector<8x128xf32>
      tpu.vector_store %arg2[%c0_55, %c0_56], %141 {strides = array<i32>} : memref<8x128xf32, #tpu.memory_space<vmem>>, vector<8x128xf32>,
    } else {
    }
    return
  }
  func.func @transform_0(%arg0: i32) -> (i32, i32, i32) {
    %c0_i32 = arith.constant 0 : i32
    %c0_i32_0 = arith.constant 0 : i32
    %c0_i32_1 = arith.constant 0 : i32
    return %c0_i32, %arg0, %c0_i32_0 : i32, i32, i32
  }
  func.func @transform_1(%arg0: i32) -> (i32, i32) {
    %c0_i32 = arith.constant 0 : i32
    %c0_i32_0 = arith.constant 0 : i32
    %c0_i32_1 = arith.constant 0 : i32
    return %c0_i32, %c0_i32_0 : i32, i32
  }
}

</mosaic_0001>

<llo_original>
// kernel: tpu_custom_call.1
$region0: #{tpu_custom_call.1}
  #allocation0 [shape = 'u32[]', space=smem, size = 0x4, offset = 0x4, fixed_abs, tag = 'smem constant byte address 0x4 - core index']
  #allocation1 [shape = 'u32[72,128]{1,0:T(1,128)}', space=vmem, size = 0x9000, scoped, tag = 'internal scratch']
  #allocation2 [shape = 'f32[8,128]{1,0:T(8,128)}', space=vmem, size = 0x1000, scoped, tag = 'scratch operand']
  #allocation3 [shape = 'f32[8,128]{1,0:T(8,128)}', space=vmem, size = 0x1000, scoped, tag = 'scratch operand']
  %s0 = inlined_call_operand.hbm [shape: f32[6,8,128], index: 0, kind: input, shape index: {}]
  %s1 = inlined_call_operand.hbm [shape: f32[8,128], index: 1, kind: output, shape index: {}]
  %s2 = sld [smem:[#allocation0]]
  $region26: #{tpu_custom_call.1} parent=0
    _
  %s4 = ssub.s32 1, %s2
  %s5 = scalar_select 0, %s4, %s2
  $region1: #{tpu_custom_call.1} parent=0
    #allocation4 [shape = 'u8[24576]{0}', space=vmem, size = 0x6000, scoped, tag = 'input window, operand 0, single buffered']
    #allocation5 [shape = 's32[1]{0}', space=sflag, size = 0x4, scoped, tag = 'scoped memory for tpu_custom_call.1']
    #allocation6 [shape = 's32[1]{0}', space=sflag, size = 0x4, scoped, tag = 'scoped memory for tpu_custom_call.1']
    #allocation7 [shape = 'u8[4096]{0}', space=vmem, size = 0x1000, scoped, tag = 'output window, operand 0, single buffered']
    %6 = vsyncpa [#allocation5], 0
    %7 = vsyncpa [#allocation6], 0
    // Predicated region
    $region2: #{tpu_custom_call.1} parent=1 // pred_check
      _
    $region3: #{tpu_custom_call.1} parent=1 // pred_check_branch
      %9 = sbr.rel (0) target = $region5
    $region4: #{tpu_custom_call.1} parent=1 // pred_region
      %11 = vsyncadd [#allocation5], 0
      %s12 = sshll.u32 %s0, 4
      %s13 = int_to_ptr.hbm [resolvable:$true] %s12
      %s14 = sshll.u32 [#allocation4], 4
      %s15 = int_to_ptr.vmem [resolvable:$true] %s14
      %20 = dma.hbm_to_vmem [thread:$0]  %s13, 768, %s15, [#allocation5], 128, 128, 8
    $region5: #{tpu_custom_call.1} parent=1 // pred_fallthru
      _
    // Predicated region
    $region6: #{tpu_custom_call.1} parent=1 // pred_check
      _
    $region7: #{tpu_custom_call.1} parent=1 // pred_check_branch
      %22 = sbr.rel (0) target = $region9
    $region8: #{tpu_custom_call.1} parent=1 // pred_region
      %24 = dma.done [#allocation5], 768
    $region9: #{tpu_custom_call.1} parent=1 // pred_fallthru
      _
    %p25 = scmp.eq.s32.totalorder 0, 0
    // Predicated region
    $region10: #{tpu_custom_call.1} parent=1 // pred_check
      %p26 = pneg %p25
    $region11: #{tpu_custom_call.1} parent=1 // pred_check_branch
      %28 = sbr.rel (%p26) target = $region13
    $region12: #{tpu_custom_call.1} parent=1 // pred_region
      %29 = vst [vmem:[#allocation2] sm:$0xff] 0.0
      %30 = vst [vmem:[#allocation3] sm:$0xff] 0.0
    $region13: #{tpu_custom_call.1} parent=1 // pred_fallthru
      _
    %v31 = vld [vmem:[#allocation4] sm:$0xff]
    %s32 = scalar_lea.vmem [#allocation4], 8
    %v33 = vld [vmem:[%s32] sm:$0xff]
    %s34 = scalar_lea.vmem [#allocation4], 16
    %v35 = vld [vmem:[%s34] sm:$0xff]
    %s36 = scalar_lea.vmem [#allocation4], 24
    %v37 = vld [vmem:[%s36] sm:$0xff]
    %s38 = scalar_lea.vmem [#allocation4], 32
    %v39 = vld [vmem:[%s38] sm:$0xff]
    %s40 = scalar_lea.vmem [#allocation4], 40
    %v41 = vld [vmem:[%s40] sm:$0xff]
    %v42 = vmax.f32 %v31, 0.0
    %v43 = vand.u32 2147483647, %v31
    %v44 = vsub.f32 0.0, %v43
    %v45 = vmul.f32 %v44, 1.442695
    %v46 = vpow.pop %v45
    %v47 = vadd.f32 %v46, 1.0
    %v48 = vlog2.pop %v47
    %v49 = vmul.f32 %v48, 0.6931472
    %v50 = vadd.f32 %v42, %v49
    %v51 = vtanh.pop %v33
    %v52 = vmul.f32 %v51, 0.2
    %v53 = vadd.f32 %v37, %v52
    %v54 = vmul.f32 %v53, %v35
    %v55 = vmul.f32 %v54, %v54
    %v56 = vmul.f32 %v55, %v55
    %v57 = vmul.f32 %v56, %v55
    %v58 = vmul.f32 %v57, %v57
    %v59 = vsub.f32 %v58, %v57
    %v60 = vmin.f32 %v59, 100.0
    %v61 = vmul.f32 %v50, %v39
    %v62 = vmax.f32 %v61, 1.5
    %v63 = vmin.f32 %v62, 5.6
    %v64 = vmul.f32 %v63, %v60
    %v65 = vcvt.f32.s32.to.zero.pseudo %v41
    %vm66 = vcmp.eq.s32.totalorder %v65, 0
    %v67 = vsel %vm66, 1, 0
    %v68 = vcvt.s32.f32 %v67
    %v69 = vmul.f32 %v68, %v64
    %v70 = vrot.slane %v69, 4
    %v71 = vadd.f32 %v69, %v70
    %v72 = vrot.slane %v71, 2
    %v73 = vadd.f32 %v71, %v72
    %v74 = vrot.slane %v73, 1
    %v75 = vadd.f32 %v73, %v74
    %v76 = vrot.slane %v68, 4
    %v77 = vadd.f32 %v68, %v76
    %v78 = vrot.slane %v77, 2
    %v79 = vadd.f32 %v77, %v78
    %v80 = vrot.slane %v79, 1
    %v81 = vadd.f32 %v79, %v80
    %vm82 = vcmp.eq.s32.totalorder %v65, 1
    %v83 = vsel %vm82, 1, 0
    %v84 = vcvt.s32.f32 %v83
    %v85 = vmul.f32 %v84, %v64
    %v86 = vrot.slane %v85, 4
    %v87 = vadd.f32 %v85, %v86
    %v88 = vrot.slane %v87, 2
    %v89 = vadd.f32 %v87, %v88
    %v90 = vrot.slane %v89, 1
    %v91 = vadd.f32 %v89, %v90
    %v92 = vrot.slane %v84, 4
    %v93 = vadd.f32 %v84, %v92
    %v94 = vrot.slane %v93, 2
    %v95 = vadd.f32 %v93, %v94
    %v96 = vrot.slane %v95, 1
    %v97 = vadd.f32 %v95, %v96
    %vm98 = vcmp.eq.s32.totalorder %v65, 2
    %v99 = vsel %vm98, 1, 0
    %v100 = vcvt.s32.f32 %v99
    %v101 = vmul.f32 %v100, %v64
    %v102 = vrot.slane %v101, 4
    %v103 = vadd.f32 %v101, %v102
    %v104 = vrot.slane %v103, 2
    %v105 = vadd.f32 %v103, %v104
    %v106 = vrot.slane %v105, 1
    %v107 = vadd.f32 %v105, %v106
    %v108 = vrot.slane %v100, 4
    %v109 = vadd.f32 %v100, %v108
    %v110 = vrot.slane %v109, 2
    %v111 = vadd.f32 %v109, %v110
    %v112 = vrot.slane %v111, 1
    %v113 = vadd.f32 %v111, %v112
    %vm114 = vcmp.eq.s32.totalorder %v65, 3
    %v115 = vsel %vm114, 1, 0
    %v116 = vcvt.s32.f32 %v115
    %v117 = vmul.f32 %v116, %v64
    %v118 = vrot.slane %v117, 4
    %v119 = vadd.f32 %v117, %v118
    %v120 = vrot.slane %v119, 2
    %v121 = vadd.f32 %v119, %v120
    %v122 = vrot.slane %v121, 1
    %v123 = vadd.f32 %v121, %v122
    %v124 = vrot.slane %v116, 4
    %v125 = vadd.f32 %v116, %v124
    %v126 = vrot.slane %v125, 2
    %v127 = vadd.f32 %v125, %v126
    %v128 = vrot.slane %v127, 1
    %v129 = vadd.f32 %v127, %v128
    %vm130 = vcmp.eq.s32.totalorder %v65, 4
    %v131 = vsel %vm130, 1, 0
    %v132 = vcvt.s32.f32 %v131
    %v133 = vmul.f32 %v132, %v64
    %v134 = vrot.slane %v133, 4
    %v135 = vadd.f32 %v133, %v134
    %v136 = vrot.slane %v135, 2
    %v137 = vadd.f32 %v135, %v136
    %v138 = vrot.slane %v137, 1
    %v139 = vadd.f32 %v137, %v138
    %v140 = vrot.slane %v132, 4
    %v141 = vadd.f32 %v132, %v140
    %v142 = vrot.slane %v141, 2
    %v143 = vadd.f32 %v141, %v142
    %v144 = vrot.slane %v143, 1
    %v145 = vadd.f32 %v143, %v144
    %vm146 = vcmp.eq.s32.totalorder %v65, 5
    %v147 = vsel %vm146, 1, 0
    %v148 = vcvt.s32.f32 %v147
    %v149 = vmul.f32 %v148, %v64
    %v150 = vrot.slane %v149, 4
    %v151 = vadd.f32 %v149, %v150
    %v152 = vrot.slane %v151, 2
    %v153 = vadd.f32 %v151, %v152
    %v154 = vrot.slane %v153, 1
    %v155 = vadd.f32 %v153, %v154
    %v156 = vrot.slane %v148, 4
    %v157 = vadd.f32 %v148, %v156
    %v158 = vrot.slane %v157, 2
    %v159 = vadd.f32 %v157, %v158
    %v160 = vrot.slane %v159, 1
    %v161 = vadd.f32 %v159, %v160
    %vm162 = vcmp.eq.s32.totalorder %v65, 6
    %v163 = vsel %vm162, 1, 0
    %v164 = vcvt.s32.f32 %v163
    %v165 = vmul.f32 %v164, %v64
    %v166 = vrot.slane %v165, 4
    %v167 = vadd.f32 %v165, %v166
    %v168 = vrot.slane %v167, 2
    %v169 = vadd.f32 %v167, %v168
    %v170 = vrot.slane %v169, 1
    %v171 = vadd.f32 %v169, %v170
    %v172 = vrot.slane %v164, 4
    %v173 = vadd.f32 %v164, %v172
    %v174 = vrot.slane %v173, 2
    %v175 = vadd.f32 %v173, %v174
    %v176 = vrot.slane %v175, 1
    %v177 = vadd.f32 %v175, %v176
    %vm178 = vcmp.eq.s32.totalorder %v65, 7
    %v179 = vsel %vm178, 1, 0
    %v180 = vcvt.s32.f32 %v179
    %v181 = vmul.f32 %v180, %v64
    %v182 = vrot.slane %v181, 4
    %v183 = vadd.f32 %v181, %v182
    %v184 = vrot.slane %v183, 2
    %v185 = vadd.f32 %v183, %v184
    %v186 = vrot.slane %v185, 1
    %v187 = vadd.f32 %v185, %v186
    %v188 = vrot.slane %v180, 4
    %v189 = vadd.f32 %v180, %v188
    %v190 = vrot.slane %v189, 2
    %v191 = vadd.f32 %v189, %v190
    %v192 = vrot.slane %v191, 1
    %v193 = vadd.f32 %v191, %v192
    %v194 = vld [vmem:[#allocation2] sm:$0xff]
    %vm195 = vcmask 1040384
    %v196 = vsel %vm195, %v75, %v91
    %vm197 = vcmask 1041408
    %v198 = vsel %vm197, %v196, %v107
    %vm199 = vcmask 1042432
    %v200 = vsel %vm199, %v198, %v123
    %vm201 = vcmask 1043456
    %v202 = vsel %vm201, %v200, %v139
    %vm203 = vcmask 1044480
    %v204 = vsel %vm203, %v202, %v155
    %vm205 = vcmask 1045504
    %v206 = vsel %vm205, %v204, %v171
    %vm207 = vcmask 1046528
    %v208 = vsel %vm207, %v206, %v187
    %v209 = vadd.f32 %v194, %v208
    %210 = vst [vmem:[#allocation2] sm:$0xff] %v209
    %v211 = vld [vmem:[#allocation3] sm:$0xff]
    %v212 = vsel %vm195, %v81, %v97
    %v213 = vsel %vm197, %v212, %v113
    %v214 = vsel %vm199, %v213, %v129
    %v215 = vsel %vm201, %v214, %v145
    %v216 = vsel %vm203, %v215, %v161
    %v217 = vsel %vm205, %v216, %v177
    %v218 = vsel %vm207, %v217, %v193
    %v219 = vadd.f32 %v211, %v218
    %220 = vst [vmem:[#allocation3] sm:$0xff] %v219
    // Predicated region
    $region14: #{tpu_custom_call.1} parent=1 // pred_check
      %p221 = pneg %p25
    $region15: #{tpu_custom_call.1} parent=1 // pred_check_branch
      %223 = sbr.rel (%p221) target = $region17
    $region16: #{tpu_custom_call.1} parent=1 // pred_region
      %v224 = vld [vmem:[#allocation2] sm:$0xff]
      %225 = vadd.xlane.f32.xlu0 %v224
      %v226 = vpop.xlane.xlu0 %225
      %v227 = vld [vmem:[#allocation3] sm:$0xff]
      %228 = vadd.xlane.f32.xlu0 %v227
      %v229 = vpop.xlane.xlu0 %228
      %vm230 = vcmp.gt.f32.partialorder %v229, 0.0
      %v231 = vmax.f32 %v229, 1.0
      %v232 = vrcp.pop %v231
      %v233 = vmul.f32 %v231, %v232
      %v234 = vsub.f32 1.0, %v233
      %v235 = vmul.f32 %v232, %v234
      %v236 = vadd.f32 %v232, %v235
      %vm237 = vweird.f32 %v231
      %vm238 = vweird.f32 %v232
      %vm239 = vmor %vm237, %vm238
      %v240 = vsel %vm239, %v232, %v236
      %v241 = vand.u32 2147483647, %v231
      %vm242 = vcmp.eq.f32.partialorder %v241, 8.507059e+37
      %v243 = vand.u32 %v231, 2147483648
      %v244 = vor.u32 1.1754944e-38, %v243
      %v245 = vsel %vm242, %v244, %v240
      %v246 = vmul.f32 %v226, %v245
      %v247 = vsel %vm230, %v246, 0.0
      %248 = vst [vmem:[#allocation7] sm:$0xff] %v247
    $region17: #{tpu_custom_call.1} parent=1 // pred_fallthru
      _
    // Predicated region
    $region18: #{tpu_custom_call.1} parent=1 // pred_check
      _
    $region19: #{tpu_custom_call.1} parent=1 // pred_check_branch
      %250 = sbr.rel (0) target = $region21
    $region20: #{tpu_custom_call.1} parent=1 // pred_region
      %252 = vsyncadd [#allocation6], 0
      %s254 = sshll.u32 [#allocation7], 4
      %s255 = int_to_ptr.vmem [resolvable:$true] %s254
      %s256 = sshll.u32 %s1, 4
      %s257 = int_to_ptr.hbm [resolvable:$true] %s256
      %259 = dma.vmem_to_hbm [thread:$0]  %s255, 128, %s257, [#allocation6]
    $region21: #{tpu_custom_call.1} parent=1 // pred_fallthru
      _
    // Predicated region
    $region22: #{tpu_custom_call.1} parent=1 // pred_check
      _
    $region23: #{tpu_custom_call.1} parent=1 // pred_check_branch
      %261 = sbr.rel (0) target = $region25
    $region24: #{tpu_custom_call.1} parent=1 // pred_region
      %263 = dma.done [#allocation6], 128
    $region25: #{tpu_custom_call.1} parent=1 // pred_fallthru
      _
    %264 = vsyncpa [#allocation5], 1
    %265 = vsyncpa [#allocation6], 1

</llo_original>
